<compile_context>
chip_gen: v6e
topology: v6e:2x2x1
jax: 0.10.0
libtpu: 0.0.40
codegen_flags: <defaults>
</compile_context>

<pallas_src>
import jax
import jax.numpy as jnp
from jax.experimental import pallas as pl
from jax.experimental.pallas import tpu as pltpu

BATCH = 8      # one sublane group
IN_S = 32
IN_B = 32
HIDDEN = 128   # lane-aligned; fused output width 2*HIDDEN = 256 (MXU-native)


def net_kernel(xy_ref, w_ref, bias_ref, j_ref, s_ref, b_ref):
    # Single fused MXU push: (B, 64) @ (64, 256) -> (B, 256) f32 accumulate.
    out = jnp.dot(xy_ref[...], w_ref[...], preferred_element_type=jnp.float32)
    # One lane-dense bias add over the whole (B, 256) slab: [s_raw|b_raw] + [bs|bb].
    sb = out + bias_ref[...]
    H = s_ref.shape[1]
    s = sb[:, :H]          # lane-boundary-aligned slices (128 lanes each)
    b = sb[:, H:]
    s_ref[...] = s.astype(s_ref.dtype)
    b_ref[...] = b.astype(b_ref.dtype)
    j_ref[...] = (s + b).astype(j_ref.dtype)   # join j = elementwise add


def net_forward(x, y, ws, bs, wb, bb):
    """x: (B, IN_S), y: (B, IN_B); torch-style weights ws: (H, IN_S), wb: (H, IN_B)."""
    B = x.shape[0]
    H = ws.shape[0]
    Ks, Kb = ws.shape[1], wb.shape[1]

    # --- glue: fuse the two linears into one block-diagonal matmul (done once) ---
    w_cat = jnp.zeros((Ks + Kb, 2 * H), dtype=jnp.float32)
    w_cat = w_cat.at[:Ks, :H].set(ws.T)        # diag block for branch s
    w_cat = w_cat.at[Ks:, H:].set(wb.T)        # diag block for branch b
    w_cat = w_cat.astype(jnp.bfloat16)         # bf16 inputs, f32 MXU accumulate

    xy = jnp.concatenate([x, y], axis=1).astype(jnp.bfloat16)      # (B, Ks+Kb)
    bias_cat = jnp.concatenate([bs, bb]).reshape(1, 2 * H)          # (1, 2H) f32

    vmem = pl.BlockSpec(memory_space=pltpu.MemorySpace.VMEM)        # whole-array blocks
    out_shape = (
        jax.ShapeDtypeStruct((B, H), jnp.float32),  # j(s, b)
        jax.ShapeDtypeStruct((B, H), jnp.float32),  # s
        jax.ShapeDtypeStruct((B, H), jnp.float32),  # b
    )
    return pl.pallas_call(
        net_kernel,
        in_specs=[vmem, vmem, vmem],
        out_specs=(vmem, vmem, vmem),
        out_shape=out_shape,
    )(xy, w_cat, bias_cat)


if __name__ == "__main__":
    key = jax.random.PRNGKey(0)
    kx, ky, kws, kbs, kwb, kbb = jax.random.split(key, 6)

    x = jax.random.normal(kx, (BATCH, IN_S), dtype=jnp.float32)
    y = jax.random.normal(ky, (BATCH, IN_B), dtype=jnp.float32)

    # deterministic "parameter init" (torch-style shapes: (out, in))
    ws = jax.random.normal(kws, (HIDDEN, IN_S), dtype=jnp.float32) * 0.05
    bs = jax.random.normal(kbs, (HIDDEN,), dtype=jnp.float32) * 0.05
    wb = jax.random.normal(kwb, (HIDDEN, IN_B), dtype=jnp.float32) * 0.05
    bb = jax.random.normal(kbb, (HIDDEN,), dtype=jnp.float32) * 0.05

    j_out, s_out, b_out = jax.block_until_ready(
        net_forward(x, y, ws, bs, wb, bb))

    # reference check in plain JAX (same bf16 input rounding as the kernel)
    xb = x.astype(jnp.bfloat16).astype(jnp.float32)
    yb = y.astype(jnp.bfloat16).astype(jnp.float32)
    wsb = ws.astype(jnp.bfloat16).astype(jnp.float32)
    wbb = wb.astype(jnp.bfloat16).astype(jnp.float32)
    s_ref = xb @ wsb.T + bs
    b_ref = yb @ wbb.T + bb
    assert jnp.allclose(s_out, s_ref, atol=2e-3, rtol=2e-3)
    assert jnp.allclose(b_out, b_ref, atol=2e-3, rtol=2e-3)
    assert jnp.allclose(j_out, s_ref + b_ref, atol=2e-3, rtol=2e-3)

    print("KERNEL_OK")
</pallas_src>

<mosaic_0001>
module attributes {stable_mosaic.version = 11 : i64} {
  func.func @net_kernel(%arg0: memref<8x64xbf16, #tpu.memory_space<vmem>>, %arg1: memref<64x256xbf16, #tpu.memory_space<vmem>>, %arg2: memref<1x256xf32, #tpu.memory_space<vmem>>, %arg3: memref<8x128xf32, #tpu.memory_space<vmem>>, %arg4: memref<8x128xf32, #tpu.memory_space<vmem>>, %arg5: memref<8x128xf32, #tpu.memory_space<vmem>>) attributes {dimension_semantics = [], scalar_prefetch = 0 : i64, scratch_operands = 0 : i64, tpu.core_type = #tpu.core_type<tc>} {
    %c0 = arith.constant 0 : index
    %c0_0 = arith.constant 0 : index
    %0 = vector.load %arg0[%c0, %c0_0] : memref<8x64xbf16, #tpu.memory_space<vmem>>, vector<8x64xbf16>
    %c0_1 = arith.constant 0 : index
    %c0_2 = arith.constant 0 : index
    %1 = vector.load %arg1[%c0_1, %c0_2] : memref<64x256xbf16, #tpu.memory_space<vmem>>, vector<64x256xbf16>
    %cst = arith.constant dense<0.000000e+00> : vector<8x256xf32>
    %2 = tpu.matmul %0, %1, %cst {dimension_numbers = #tpu.dot_dimension_numbers<[1], [0], [0], [1], [0, 0, 1, 1], [], []>} : vector<8x64xbf16>, vector<64x256xbf16>, vector<8x256xf32> -> vector<8x256xf32>
    %c0_3 = arith.constant 0 : index
    %c0_4 = arith.constant 0 : index
    %3 = vector.load %arg2[%c0_3, %c0_4] : memref<1x256xf32, #tpu.memory_space<vmem>>, vector<1x256xf32>
    %4 = vector.broadcast %3 : vector<1x256xf32> to vector<8x256xf32>
    %5 = arith.addf %2, %4 : vector<8x256xf32>
    %6 = vector.extract_strided_slice %5 {offsets = [0, 0], sizes = [8, 128], strides = [1, 1]} : vector<8x256xf32> to vector<8x128xf32>
    %7 = vector.extract_strided_slice %5 {offsets = [0, 128], sizes = [8, 128], strides = [1, 1]} : vector<8x256xf32> to vector<8x128xf32>
    %c0_5 = arith.constant 0 : index
    %c0_6 = arith.constant 0 : index
    %8 = vector.load %arg4[%c0_5, %c0_6] : memref<8x128xf32, #tpu.memory_space<vmem>>, vector<8x128xf32>
    tpu.vector_store %arg4[%c0_5, %c0_6], %6 {strides = array<i32>} : memref<8x128xf32, #tpu.memory_space<vmem>>, vector<8x128xf32>,
    %c0_7 = arith.constant 0 : index
    %c0_8 = arith.constant 0 : index
    %9 = vector.load %arg5[%c0_7, %c0_8] : memref<8x128xf32, #tpu.memory_space<vmem>>, vector<8x128xf32>
    tpu.vector_store %arg5[%c0_7, %c0_8], %7 {strides = array<i32>} : memref<8x128xf32, #tpu.memory_space<vmem>>, vector<8x128xf32>,
    %10 = arith.addf %6, %7 : vector<8x128xf32>
    %c0_9 = arith.constant 0 : index
    %c0_10 = arith.constant 0 : index
    %11 = vector.load %arg3[%c0_9, %c0_10] : memref<8x128xf32, #tpu.memory_space<vmem>>, vector<8x128xf32>
    tpu.vector_store %arg3[%c0_9, %c0_10], %10 {strides = array<i32>} : memref<8x128xf32, #tpu.memory_space<vmem>>, vector<8x128xf32>,
    return
  }
}

</mosaic_0001>

<llo_original>
// kernel: tpu_custom_call.1
$region0: #{tpu_custom_call.1}
  #allocation0 [shape = 'u32[]', space=smem, size = 0x4, offset = 0x4, fixed_abs, tag = 'smem constant byte address 0x4 - core index']
  #allocation1 [shape = 'u32[144,128]{1,0:T(1,128)}', space=vmem, size = 0x12000, scoped, tag = 'internal scratch']
  %s0 = inlined_call_operand.hbm [shape: bf16[8,64], index: 0, kind: input, shape index: {}]
  %s1 = inlined_call_operand.hbm [shape: bf16[64,256], index: 1, kind: input, shape index: {}]
  %s2 = inlined_call_operand.vmem [shape: f32[1,256], index: 2, kind: input, shape index: {}]
  %s3 = inlined_call_operand.hbm [shape: f32[8,128], index: 3, kind: output, shape index: {0}]
  %s4 = inlined_call_operand.hbm [shape: f32[8,128], index: 4, kind: output, shape index: {1}]
  %s5 = inlined_call_operand.hbm [shape: f32[8,128], index: 5, kind: output, shape index: {2}]
  %6 = xla_tuple %s3, %s4, %s5
  %s7 = sld [smem:[#allocation0]]
  $region46: #{tpu_custom_call.1} parent=0
    _
  %s9 = ssub.s32 1, %s7
  %s10 = scalar_select 0, %s9, %s7
  $region1: #{tpu_custom_call.1} parent=0
    #allocation2 [shape = 'u8[2048]{0}', space=vmem, size = 0x800, scoped, tag = 'input window, operand 0, single buffered']
    #allocation3 [shape = 's32[1]{0}', space=sflag, size = 0x4, scoped, tag = 'scoped memory for tpu_custom_call.1']
    #allocation4 [shape = 's32[1]{0}', space=sflag, size = 0x4, scoped, tag = 'scoped memory for tpu_custom_call.1']
    #allocation5 [shape = 'u8[32768]{0}', space=vmem, size = 0x8000, scoped, tag = 'input window, operand 1, single buffered']
    #allocation6 [shape = 's32[1]{0}', space=sflag, size = 0x4, scoped, tag = 'scoped memory for tpu_custom_call.1']
    #allocation7 [shape = 'u8[4096]{0}', space=vmem, size = 0x1000, scoped, tag = 'output window, operand 0, single buffered']
    #allocation8 [shape = 'u8[4096]{0}', space=vmem, size = 0x1000, scoped, tag = 'output window, operand 1, single buffered']
    #allocation9 [shape = 's32[1]{0}', space=sflag, size = 0x4, scoped, tag = 'scoped memory for tpu_custom_call.1']
    #allocation10 [shape = 'u8[4096]{0}', space=vmem, size = 0x1000, scoped, tag = 'output window, operand 2, single buffered']
    %11 = vsyncpa [#allocation3], 0
    %12 = vsyncpa [#allocation6], 0
    %13 = vsyncpa [#allocation4], 0
    %14 = vsyncpa [#allocation9], 0
    // Predicated region
    $region2: #{tpu_custom_call.1} parent=1 // pred_check
      _
    $region3: #{tpu_custom_call.1} parent=1 // pred_check_branch
      %16 = sbr.rel (0) target = $region5
    $region4: #{tpu_custom_call.1} parent=1 // pred_region
      %s18 = ssub.s32 64, 64
      %19 = vsyncadd [#allocation3], %s18
      %s21 = sshll.u32 [#allocation2], 4
      %s22 = int_to_ptr.vmem [resolvable:$true] %s21
      %24 = dma.hbm_to_vmem [thread:$0]  %s0, 64, %s22, [#allocation3]
    $region5: #{tpu_custom_call.1} parent=1 // pred_fallthru
      _
    // Predicated region
    $region6: #{tpu_custom_call.1} parent=1 // pred_check
      _
    $region7: #{tpu_custom_call.1} parent=1 // pred_check_branch
      %26 = sbr.rel (0) target = $region9
    $region8: #{tpu_custom_call.1} parent=1 // pred_region
      %s28 = ssub.s32 1024, 1024
      %29 = vsyncadd [#allocation6], %s28
      %s30 = sshll.u32 [#allocation5], 4
      %s31 = int_to_ptr.vmem [resolvable:$true] %s30
      %36 = dma.hbm_to_vmem [thread:$0]  %s1, 1024, %s31, [#allocation6], 128, 128, 8
    $region9: #{tpu_custom_call.1} parent=1 // pred_fallthru
      _
    // Predicated region
    $region10: #{tpu_custom_call.1} parent=1 // pred_check
      _
    $region11: #{tpu_custom_call.1} parent=1 // pred_check_branch
      %38 = sbr.rel (0) target = $region13
    $region12: #{tpu_custom_call.1} parent=1 // pred_region
      _
    $region13: #{tpu_custom_call.1} parent=1 // pred_fallthru
      _
    // Predicated region
    $region14: #{tpu_custom_call.1} parent=1 // pred_check
      _
    $region15: #{tpu_custom_call.1} parent=1 // pred_check_branch
      %40 = sbr.rel (0) target = $region17
    $region16: #{tpu_custom_call.1} parent=1 // pred_region
      %41 = dma.done [#allocation3], 64
    $region17: #{tpu_custom_call.1} parent=1 // pred_fallthru
      _
    // Predicated region
    $region18: #{tpu_custom_call.1} parent=1 // pred_check
      _
    $region19: #{tpu_custom_call.1} parent=1 // pred_check_branch
      %43 = sbr.rel (0) target = $region21
    $region20: #{tpu_custom_call.1} parent=1 // pred_region
      %44 = dma.done [#allocation6], 1024
    $region21: #{tpu_custom_call.1} parent=1 // pred_fallthru
      _
    %v46 = vld [vmem:[#allocation2] sm:$0xf]
    %v47 = vld [vmem:[#allocation5] sm:$0xff]
    %v48 = vld [vmem:[#allocation5 + $0x8] sm:$0xff]
    %v49 = vld [vmem:[#allocation5 + $0x10] sm:$0xff]
    %v50 = vld [vmem:[#allocation5 + $0x18] sm:$0xff]
    %v51 = vld [vmem:[#allocation5 + $0x20] sm:$0xff]
    %v52 = vld [vmem:[#allocation5 + $0x28] sm:$0xff]
    %v53 = vld [vmem:[#allocation5 + $0x30] sm:$0xff]
    %v54 = vld [vmem:[#allocation5 + $0x38] sm:$0xff]
    %v55 = vld [vmem:[%s2] sm:$0x3]
    %v57 = vlaneseq
    %v58 = vshrl.u32 %v57, 7
    %v59 = vsub.s32 0, %v58
    %v60 = vrot.slane %v55, %v59
    %v61 = vlaneseq
    %v62 = vshrl.u32 %v61, 7
    %v63 = vsub.s32 1, %v62
    %v64 = vrot.slane %v55, %v63
    %v75 = vunpack.c.l.b16 %v47
    %v76 = vunpack.c.h.b16 %v47
    %v77 = vunpack.c.l.b16 %v48
    %v78 = vunpack.c.h.b16 %v48
    %v79 = vunpack.c.l.b16 %v49
    %v80 = vunpack.c.h.b16 %v49
    %v81 = vunpack.c.l.b16 %v50
    %v82 = vunpack.c.h.b16 %v50
    %v83 = vunpack.c.l.b16 %v51
    %v84 = vunpack.c.h.b16 %v51
    %v85 = vunpack.c.l.b16 %v52
    %v86 = vunpack.c.h.b16 %v52
    %v87 = vunpack.c.l.b16 %v53
    %v88 = vunpack.c.h.b16 %v53
    %v89 = vunpack.c.l.b16 %v54
    %v90 = vunpack.c.h.b16 %v54
    %v91 = vpack.c.b16 %v77, %v75
    %v92 = vpack.c.b16 %v78, %v76
    %v93 = vpack.c.b16 %v81, %v79
    %v94 = vpack.c.b16 %v82, %v80
    %v95 = vpack.c.b16 %v85, %v83
    %v96 = vpack.c.b16 %v86, %v84
    %v97 = vpack.c.b16 %v89, %v87
    %v98 = vpack.c.b16 %v90, %v88
    %vm107 = vcmask 523264
    %v109 = vsel %vm107, %v46, 0
    %111 = vmatprep.subr.bf16.mxu0 0
    %112 = vmatpush1.bf16.msra.mxu0 0
    %113 = vmatprep.subr.bf16.mxu0 0
    %114 = vmatpush1.bf16.msra.mxu0 0
    %115 = vmatprep.subr.bf16.mxu0 0
    %116 = vmatpush1.bf16.msra.mxu0 0
    %117 = vmatprep.subr.bf16.mxu0 0
    %118 = vmatpush1.bf16.msra.mxu0 0
    %119 = vmatprep.subr.bf16.mxu0 %v98
    %120 = vmatpush1.bf16.msra.mxu0 %v97
    %121 = vmatprep.subr.bf16.mxu0 %v96
    %122 = vmatpush1.bf16.msra.mxu0 %v95
    %123 = vmatprep.subr.bf16.mxu0 %v94
    %124 = vmatpush1.bf16.msra.mxu0 %v93
    %125 = vmatprep.subr.bf16.mxu0 %v92
    %126 = vmatpush1.bf16.msra.mxu0 %v91
    %127 = vmatprep.subr.bf16.mxu0 0
    %128 = vmatpush2.bf16.msra.mxu0 0
    %129 = vmatprep.subr.bf16.mxu0 0
    %130 = vmatpush2.bf16.msra.mxu0 0
    %131 = vmatprep.subr.bf16.mxu0 0
    %132 = vmatpush2.bf16.msra.mxu0 0
    %133 = vmatprep.subr.bf16.mxu0 0
    %134 = vmatpush2.bf16.msra.mxu0 0
    %135 = vmatprep.subr.bf16.mxu0 0
    %136 = vmatpush2.bf16.msra.mxu0 0
    %137 = vmatprep.subr.bf16.mxu0 0
    %138 = vmatpush2.bf16.msra.mxu0 0
    %139 = vmatprep.subr.bf16.mxu0 0
    %140 = vmatpush2.bf16.msra.mxu0 0
    %141 = vmatprep.subr.bf16.mxu0 0
    %142 = vmatpush2.bf16.msra.mxu0 0
    %143 = vmatprep.mubr.bf16.mxu0 0
    %144 = vmatmul.mubr.bf16.gmra.mxu0 %v109
    %v145 = vpop.f32.mrf.mxu0
    %v146 = vadd.f32 %v60, %v145
    %v147 = vpop.f32.mrf.mxu0
    %v148 = vadd.f32 %v64, %v147
    %v149 = vpop.f32.mrf.mxu0
    %v150 = vpop.f32.mrf.mxu0
    %151 = vdwg.mxu0
    %152 = vst [vmem:[#allocation8] sm:$0xff] %v146
    %153 = vst [vmem:[#allocation10] sm:$0xff] %v148
    %v154 = vadd.f32 %v146, %v148
    %155 = vst [vmem:[#allocation7] sm:$0xff] %v154
    // Predicated region
    $region22: #{tpu_custom_call.1} parent=1 // pred_check
      _
    $region23: #{tpu_custom_call.1} parent=1 // pred_check_branch
      %157 = sbr.rel (0) target = $region25
    $region24: #{tpu_custom_call.1} parent=1 // pred_region
      %s159 = ssub.s32 128, 128
      %160 = vsyncadd [#allocation4], %s159
      %s162 = sshll.u32 [#allocation7], 4
      %s163 = int_to_ptr.vmem [resolvable:$true] %s162
      %165 = dma.vmem_to_hbm [thread:$0]  %s163, 128, %s3, [#allocation4]
    $region25: #{tpu_custom_call.1} parent=1 // pred_fallthru
      _
    // Predicated region
    $region26: #{tpu_custom_call.1} parent=1 // pred_check
      _
    $region27: #{tpu_custom_call.1} parent=1 // pred_check_branch
      %167 = sbr.rel (0) target = $region29
    $region28: #{tpu_custom_call.1} parent=1 // pred_region
      %s169 = ssub.s32 128, 128
      %170 = vsyncadd [#allocation9], %s169
      %s172 = sshll.u32 [#allocation8], 4
      %s173 = int_to_ptr.vmem [resolvable:$true] %s172
      %175 = dma.vmem_to_hbm [thread:$0]  %s173, 128, %s4, [#allocation9]
    $region29: #{tpu_custom_call.1} parent=1 // pred_fallthru
      _
    // Predicated region
    $region30: #{tpu_custom_call.1} parent=1 // pred_check
      _
    $region31: #{tpu_custom_call.1} parent=1 // pred_check_branch
      %177 = sbr.rel (0) target = $region33
    $region32: #{tpu_custom_call.1} parent=1 // pred_region
      %s179 = ssub.s32 128, 128
      %180 = vsyncadd [#allocation9], %s179
      %s182 = sshll.u32 [#allocation10], 4
      %s183 = int_to_ptr.vmem [resolvable:$true] %s182
      %185 = dma.vmem_to_hbm [thread:$0]  %s183, 128, %s5, [#allocation9]
    $region33: #{tpu_custom_call.1} parent=1 // pred_fallthru
      _
    // Predicated region
    $region34: #{tpu_custom_call.1} parent=1 // pred_check
      _
    $region35: #{tpu_custom_call.1} parent=1 // pred_check_branch
      %187 = sbr.rel (0) target = $region37
    $region36: #{tpu_custom_call.1} parent=1 // pred_region
      %188 = dma.done [#allocation4], 128
    $region37: #{tpu_custom_call.1} parent=1 // pred_fallthru
      _
    // Predicated region
    $region38: #{tpu_custom_call.1} parent=1 // pred_check
      _
    $region39: #{tpu_custom_call.1} parent=1 // pred_check_branch
      %190 = sbr.rel (0) target = $region41
    $region40: #{tpu_custom_call.1} parent=1 // pred_region
      %191 = dma.done [#allocation9], 128
    $region41: #{tpu_custom_call.1} parent=1 // pred_fallthru
      _
    // Predicated region
    $region42: #{tpu_custom_call.1} parent=1 // pred_check
      _
    $region43: #{tpu_custom_call.1} parent=1 // pred_check_branch
      %193 = sbr.rel (0) target = $region45
    $region44: #{tpu_custom_call.1} parent=1 // pred_region
      %194 = dma.done [#allocation9], 128
    $region45: #{tpu_custom_call.1} parent=1 // pred_fallthru
      _
    %195 = vsyncpa [#allocation3], 1
    %196 = vsyncpa [#allocation6], 1
    %197 = vsyncpa [#allocation4], 1
    %198 = vsyncpa [#allocation9], 1

</llo_original>
